<compile_context>
chip_gen: v7x
topology: tpu7x:2x2x1
jax: 0.10.0
libtpu: 0.0.40
codegen_flags: <defaults>
</compile_context>

<pallas_src>
import jax
import jax.numpy as jnp
from jax.experimental import pallas as pl
from jax.experimental.pallas import tpu as pltpu

_LANE = 128


def _cdiv(a, b):
    return -(-a // b)


def _round_up(a, b):
    return _cdiv(a, b) * b


def _chip_params():
    """Return (vmem_capacity_bytes, tensorcores_per_chip) with safe fallbacks."""
    vmem_cap = 64 << 20            # conservative default = v7x per-core VMEM
    num_tc = None
    try:
        info = pltpu.get_tpu_info()
        for name in ("vmem_capacity_bytes", "vmem_size_bytes", "vmem_bytes"):
            v = getattr(info, name, None)
            if v:
                vmem_cap = int(v)
                break
        for name in ("num_cores", "core_count", "num_tensorcores"):
            v = getattr(info, name, None)
            if v:
                num_tc = int(v)
                break
    except Exception:
        pass
    if num_tc is None:
        # v7x is the only target generation with 64 MiB VMEM, and it has 2 TCs.
        num_tc = 2 if vmem_cap < (96 << 20) else 1
    return vmem_cap, num_tc


def miou_pallas(inputs, targets, smooth: float = 1e-6):
    """inputs: (N, C, H, W) float logits; targets: (N, 2, H, W) (any numeric)."""
    N, C, H, W = inputs.shape
    assert targets.shape == (N, 2, H, W), "targets must have 2 channels (bg, fg)"
    assert C >= 2, "need a background channel and at least one foreground channel"

    HW = H * W
    isz = jnp.dtype(inputs.dtype).itemsize
    k_bytes = C * isz + 1                       # kernel HBM bytes per pixel/sample

    vmem_cap, num_tc = _chip_params()
    # Per-grid-step HBM budget: large enough to amortize ~0.35us step overhead
    # against the chip's HBM rate, small enough to double-buffer comfortably.
    step_budget = (4 << 20) if vmem_cap >= (96 << 20) else (6 << 20)

    # ---- spatial tile T: lane-dense, multiple of 128, balanced across tiles ----
    hw128 = _round_up(HW, _LANE)
    rows_min = min(N, 8)
    t_cap = max(_LANE, (step_budget // (rows_min * k_bytes)) // _LANE * _LANE)
    t_cap = min(t_cap, hw128)
    num_s = _cdiv(hw128, t_cap)
    T = _round_up(_cdiv(hw128, num_s), _LANE)
    num_s = _cdiv(HW, T)
    needs_mask = (num_s * T) != HW              # last spatial tile reads past HW
    last_s = num_s - 1

    # ---- batch block Nb: the full batch, or a sublane-aligned multiple of 8 ----
    nb_budget = max(1, step_budget // (T * k_bytes))
    if nb_budget >= N or N <= 8:
        Nb = N
    else:
        Nb = min(N, max(8, (nb_budget // 8) * 8))
    if num_tc >= 2 and N >= 16 and _cdiv(N, Nb) < 2:
        Nb = max(8, (((N + 1) // 2) // 8) * 8)  # give both TensorCores grid work
    num_nb = _cdiv(N, Nb)

    # ---- host-side prep: one fused pass each, NO padding copies ----------------
    x = inputs.reshape(N, C, HW)                                  # lane-dense logits
    tb = targets != 0
    t_packed = (tb[:, 0].astype(jnp.int8)
                + tb[:, 1].astype(jnp.int8) * jnp.int8(2)).reshape(N, HW)

    def kernel(x_ref, t_ref, o_ref, inter_ref, union_ref):
        s = pl.program_id(1)

        @pl.when(s == 0)
        def _():
            inter_ref[...] = jnp.zeros_like(inter_ref)
            union_ref[...] = jnp.zeros_like(union_ref)

        logits = x_ref[...]                               # (Nb, C, T) native dtype
        # softmax is monotonic; argmax != 0  <=>  max over ALL channels strictly
        # exceeds channel 0 (ties resolve to background = argmax-first semantics).
        fg_pred = jnp.max(logits, axis=1) > logits[:, 0, :]       # (Nb, T) bool

        code = t_ref[...].astype(jnp.int32)               # (Nb, T): bit0=bg, bit1=fg
        t_bg = (code & 1) != 0
        t_fg = (code & 2) != 0

        if needs_mask:                                    # traced only if HW % T != 0
            lane = jax.lax.broadcasted_iota(jnp.int32, (Nb, T), 1) + s * T
            valid = lane < HW
            fg_pred = jnp.logical_and(fg_pred, valid)
            t_bg = jnp.logical_and(t_bg, valid)
            t_fg = jnp.logical_and(t_fg, valid)

        def count(m):                                     # (Nb, T) bool -> (Nb, 1) i32
            return jnp.sum(m.astype(jnp.float32), axis=-1,
                           keepdims=True).astype(jnp.int32)

        cnt_fg = count(fg_pred)                           # |fg_pred|
        cnt_t_fg = count(t_fg)                            # |t_fg|
        cnt_t_bg = count(t_bg)                            # |t_bg|
        inter_fg = count(jnp.logical_and(fg_pred, t_fg))  # |fg_pred & t_fg|
        cross_bg = count(jnp.logical_and(fg_pred, t_bg))  # |fg_pred & t_bg|

        # inter_bg = |t_bg| - |t_bg & fg_pred|
        # union_bg = n_valid - |fg_pred| + |t_bg & fg_pred|  (Σ n_valid = HW, added
        #                                                     once at finalize)
        # union_fg = |fg_pred| + |t_fg| - inter_fg
        inter_ref[:, 0:1] += cnt_t_bg - cross_bg
        inter_ref[:, 1:2] += inter_fg
        union_ref[:, 0:1] += cross_bg - cnt_fg
        union_ref[:, 1:2] += cnt_fg + cnt_t_fg - inter_fg

        @pl.when(s == last_s)
        def _():
            col = jax.lax.broadcasted_iota(jnp.int32, (Nb, 2), 1)
            union = union_ref[...] + jnp.where(col == 0, HW, 0)
            o_ref[...] = ((inter_ref[...].astype(jnp.float32) + smooth)
                          / (union.astype(jnp.float32) + smooth))

    # VMEM: double-buffered input blocks (sublane-padded estimates) + headroom.
    dbuf_bytes = 2 * (Nb * max(C, 8) * T * isz + max(Nb, 32) * T)
    vmem_limit = int(min(max(32 << 20, dbuf_bytes + (8 << 20)),
                         vmem_cap - (8 << 20)))

    cost = pl.CostEstimate(
        flops=int(N * HW * (C + 12)),
        transcendentals=0,
        bytes_accessed=int(N * C * HW * isz + N * HW + N * 2 * 4),
    )

    iou = pl.pallas_call(
        kernel,
        out_shape=jax.ShapeDtypeStruct((num_nb, Nb, 2), jnp.float32),
        grid_spec=pltpu.PrefetchScalarGridSpec(
            num_scalar_prefetch=0,
            grid=(num_nb, num_s),                        # (batch blocks, spatial tiles)
            in_specs=[
                pl.BlockSpec((Nb, C, T), lambda nb, s: (nb, 0, s)),
                pl.BlockSpec((Nb, T), lambda nb, s: (nb, s)),
            ],
            out_specs=pl.BlockSpec((None, Nb, 2), lambda nb, s: (nb, 0, 0)),
            scratch_shapes=[
                pltpu.VMEM((Nb, 2), jnp.int32),          # running intersections
                pltpu.VMEM((Nb, 2), jnp.int32),          # running unions (minus HW)
            ],
        ),
        compiler_params=pltpu.CompilerParams(
            dimension_semantics=("parallel", "arbitrary"),
            vmem_limit_bytes=vmem_limit,
        ),
        cost_estimate=cost,
    )(x, t_packed)

    iou = iou.reshape(num_nb * Nb, 2)[:N]                # drop batch-edge garbage rows
    return jnp.mean(iou)                                 # tiny mean stays in plain JAX


def miou_ref(inputs, targets, smooth: float = 1e-6):
    """Pure-JAX reference matching the PyTorch module exactly."""
    probs = jax.nn.softmax(inputs, axis=-3)
    cls = jnp.argmax(probs, axis=-3, keepdims=True)      # (N, 1, H, W)
    fg = cls.astype(bool)
    bg = jnp.logical_not(fg)
    pred = jnp.concatenate([bg, fg], axis=-3)            # (N, 2, H, W)
    tgt = targets.astype(bool)
    inter = jnp.sum(jnp.logical_and(pred, tgt), axis=(-2, -1)).astype(jnp.float32)
    union = jnp.sum(jnp.logical_or(pred, tgt), axis=(-2, -1)).astype(jnp.float32)
    iou = (inter + smooth) / (union + smooth)
    return jnp.mean(iou)


if __name__ == "__main__":
    key = jax.random.PRNGKey(0)
    k1, k2 = jax.random.split(key)

    N, C, H, W = 2, 4, 16, 16
    inputs = jax.random.normal(k1, (N, C, H, W), dtype=jnp.float32)
    targets = (jax.random.uniform(k2, (N, 2, H, W)) > 0.5).astype(jnp.float32)

    result = jax.block_until_ready(miou_pallas(inputs, targets))
    expected = jax.block_until_ready(miou_ref(inputs, targets))

    assert jnp.allclose(result, expected, atol=1e-5, rtol=1e-5), (result, expected)
    print("KERNEL_OK")
</pallas_src>

<mosaic_0001>
module attributes {stable_mosaic.version = 11 : i64} {
  func.func @kernel(%arg0: i32, %arg1: i32, %arg2: memref<2x4x256xf32, #tpu.memory_space<vmem>>, %arg3: memref<2x256xi8, #tpu.memory_space<vmem>>, %arg4: memref<1x2x2xf32, #tpu.memory_space<vmem>>, %arg5: memref<2x2xi32, #tpu.memory_space<vmem>>, %arg6: memref<2x2xi32, #tpu.memory_space<vmem>>) attributes {dimension_semantics = [#tpu.dimension_semantics<parallel>, #tpu.dimension_semantics<arbitrary>], iteration_bounds = array<i64: 1, 1>, scalar_prefetch = 0 : i64, scratch_operands = 2 : i64, tpu.core_type = #tpu.core_type<tc>, window_params = [{transform_indices = @transform_0, window_bounds = array<i64: 2, 4, 256>}, {transform_indices = @transform_1, window_bounds = array<i64: 2, 256>}, {transform_indices = @transform_2, window_bounds = array<i64: 1, 2, 2>}]} {
    %c0_i32 = arith.constant 0 : i32
    %0 = arith.cmpi eq, %arg1, %c0_i32 : i32
    %1 = arith.extui %0 : i1 to i32
    %c0_i32_0 = arith.constant 0 : i32
    %2 = arith.cmpi ne, %1, %c0_i32_0 : i32
    scf.if %2 {
      %c0_i32_29 = arith.constant 0 : i32
      %64 = vector.broadcast %c0_i32_29 : i32 to vector<2x2xi32>
      %c0_30 = arith.constant 0 : index
      %c0_31 = arith.constant 0 : index
      %65 = vector.load %arg5[%c0_30, %c0_31] : memref<2x2xi32, #tpu.memory_space<vmem>>, vector<2x2xi32>
      tpu.vector_store %arg5[%c0_30, %c0_31], %64 {strides = array<i32>} : memref<2x2xi32, #tpu.memory_space<vmem>>, vector<2x2xi32>,
      %c0_i32_32 = arith.constant 0 : i32
      %66 = vector.broadcast %c0_i32_32 : i32 to vector<2x2xi32>
      %c0_33 = arith.constant 0 : index
      %c0_34 = arith.constant 0 : index
      %67 = vector.load %arg6[%c0_33, %c0_34] : memref<2x2xi32, #tpu.memory_space<vmem>>, vector<2x2xi32>
      tpu.vector_store %arg6[%c0_33, %c0_34], %66 {strides = array<i32>} : memref<2x2xi32, #tpu.memory_space<vmem>>, vector<2x2xi32>,
    } else {
    }
    %c0 = arith.constant 0 : index
    %c0_1 = arith.constant 0 : index
    %c0_2 = arith.constant 0 : index
    %3 = vector.load %arg2[%c0, %c0_1, %c0_2] : memref<2x4x256xf32, #tpu.memory_space<vmem>>, vector<2x4x256xf32>
    %cst = arith.constant dense<0xFF800000> : vector<2x256xf32>
    %4 = vector.multi_reduction <maximumf>, %3, %cst [1] : vector<2x4x256xf32> to vector<2x256xf32>
    %5 = vector.extract_strided_slice %3 {offsets = [0, 0, 0], sizes = [2, 1, 256], strides = [1, 1, 1]} : vector<2x4x256xf32> to vector<2x1x256xf32>
    %6 = vector.shape_cast %5 : vector<2x1x256xf32> to vector<2x256xf32>
    %7 = arith.cmpf ogt, %4, %6 : vector<2x256xf32>
    %c0_3 = arith.constant 0 : index
    %c0_4 = arith.constant 0 : index
    %8 = vector.load %arg3[%c0_3, %c0_4] : memref<2x256xi8, #tpu.memory_space<vmem>>, vector<2x256xi8>
    %9 = arith.extsi %8 : vector<2x256xi8> to vector<2x256xi32>
    %c1_i32 = arith.constant 1 : i32
    %10 = vector.broadcast %c1_i32 : i32 to vector<2x256xi32>
    %11 = arith.andi %9, %10 : vector<2x256xi32>
    %c0_i32_5 = arith.constant 0 : i32
    %12 = vector.broadcast %c0_i32_5 : i32 to vector<2x256xi32>
    %13 = arith.cmpi ne, %11, %12 : vector<2x256xi32>
    %c2_i32 = arith.constant 2 : i32
    %14 = vector.broadcast %c2_i32 : i32 to vector<2x256xi32>
    %15 = arith.andi %9, %14 : vector<2x256xi32>
    %c0_i32_6 = arith.constant 0 : i32
    %16 = vector.broadcast %c0_i32_6 : i32 to vector<2x256xi32>
    %17 = arith.cmpi ne, %15, %16 : vector<2x256xi32>
    %18 = arith.extui %7 : vector<2x256xi1> to vector<2x256xi32>
    %19 = arith.sitofp %18 : vector<2x256xi32> to vector<2x256xf32>
    %cst_7 = arith.constant dense<0.000000e+00> : vector<2xf32>
    %20 = vector.multi_reduction <add>, %19, %cst_7 [1] : vector<2x256xf32> to vector<2xf32>
    %21 = vector.shape_cast %20 : vector<2xf32> to vector<2x1xf32>
    %22 = arith.fptosi %21 : vector<2x1xf32> to vector<2x1xi32>
    %23 = arith.extui %17 : vector<2x256xi1> to vector<2x256xi32>
    %24 = arith.sitofp %23 : vector<2x256xi32> to vector<2x256xf32>
    %cst_8 = arith.constant dense<0.000000e+00> : vector<2xf32>
    %25 = vector.multi_reduction <add>, %24, %cst_8 [1] : vector<2x256xf32> to vector<2xf32>
    %26 = vector.shape_cast %25 : vector<2xf32> to vector<2x1xf32>
    %27 = arith.fptosi %26 : vector<2x1xf32> to vector<2x1xi32>
    %28 = arith.extui %13 : vector<2x256xi1> to vector<2x256xi32>
    %29 = arith.sitofp %28 : vector<2x256xi32> to vector<2x256xf32>
    %cst_9 = arith.constant dense<0.000000e+00> : vector<2xf32>
    %30 = vector.multi_reduction <add>, %29, %cst_9 [1] : vector<2x256xf32> to vector<2xf32>
    %31 = vector.shape_cast %30 : vector<2xf32> to vector<2x1xf32>
    %32 = arith.fptosi %31 : vector<2x1xf32> to vector<2x1xi32>
    %33 = arith.andi %7, %17 : vector<2x256xi1>
    %34 = arith.extui %33 : vector<2x256xi1> to vector<2x256xi32>
    %35 = arith.sitofp %34 : vector<2x256xi32> to vector<2x256xf32>
    %cst_10 = arith.constant dense<0.000000e+00> : vector<2xf32>
    %36 = vector.multi_reduction <add>, %35, %cst_10 [1] : vector<2x256xf32> to vector<2xf32>
    %37 = vector.shape_cast %36 : vector<2xf32> to vector<2x1xf32>
    %38 = arith.fptosi %37 : vector<2x1xf32> to vector<2x1xi32>
    %39 = arith.andi %7, %13 : vector<2x256xi1>
    %40 = arith.extui %39 : vector<2x256xi1> to vector<2x256xi32>
    %41 = arith.sitofp %40 : vector<2x256xi32> to vector<2x256xf32>
    %cst_11 = arith.constant dense<0.000000e+00> : vector<2xf32>
    %42 = vector.multi_reduction <add>, %41, %cst_11 [1] : vector<2x256xf32> to vector<2xf32>
    %43 = vector.shape_cast %42 : vector<2xf32> to vector<2x1xf32>
    %44 = arith.fptosi %43 : vector<2x1xf32> to vector<2x1xi32>
    %c0_12 = arith.constant 0 : index
    %c0_13 = arith.constant 0 : index
    %45 = vector.load %arg5[%c0_12, %c0_13] : memref<2x2xi32, #tpu.memory_space<vmem>>, vector<2x1xi32>
    %46 = arith.subi %32, %44 : vector<2x1xi32>
    %47 = arith.addi %45, %46 : vector<2x1xi32>
    %c0_14 = arith.constant 0 : index
    %c0_15 = arith.constant 0 : index
    %48 = vector.load %arg5[%c0_14, %c0_15] : memref<2x2xi32, #tpu.memory_space<vmem>>, vector<2x1xi32>
    tpu.vector_store %arg5[%c0_14, %c0_15], %47 {strides = array<i32>} : memref<2x2xi32, #tpu.memory_space<vmem>>, vector<2x1xi32>,
    %c0_16 = arith.constant 0 : index
    %c1 = arith.constant 1 : index
    %49 = vector.load %arg5[%c0_16, %c1] : memref<2x2xi32, #tpu.memory_space<vmem>>, vector<2x1xi32>
    %50 = arith.addi %49, %38 : vector<2x1xi32>
    %c0_17 = arith.constant 0 : index
    %c1_18 = arith.constant 1 : index
    %51 = vector.load %arg5[%c0_17, %c1_18] : memref<2x2xi32, #tpu.memory_space<vmem>>, vector<2x1xi32>
    tpu.vector_store %arg5[%c0_17, %c1_18], %50 {strides = array<i32>} : memref<2x2xi32, #tpu.memory_space<vmem>>, vector<2x1xi32>,
    %c0_19 = arith.constant 0 : index
    %c0_20 = arith.constant 0 : index
    %52 = vector.load %arg6[%c0_19, %c0_20] : memref<2x2xi32, #tpu.memory_space<vmem>>, vector<2x1xi32>
    %53 = arith.subi %44, %22 : vector<2x1xi32>
    %54 = arith.addi %52, %53 : vector<2x1xi32>
    %c0_21 = arith.constant 0 : index
    %c0_22 = arith.constant 0 : index
    %55 = vector.load %arg6[%c0_21, %c0_22] : memref<2x2xi32, #tpu.memory_space<vmem>>, vector<2x1xi32>
    tpu.vector_store %arg6[%c0_21, %c0_22], %54 {strides = array<i32>} : memref<2x2xi32, #tpu.memory_space<vmem>>, vector<2x1xi32>,
    %c0_23 = arith.constant 0 : index
    %c1_24 = arith.constant 1 : index
    %56 = vector.load %arg6[%c0_23, %c1_24] : memref<2x2xi32, #tpu.memory_space<vmem>>, vector<2x1xi32>
    %57 = arith.addi %22, %27 : vector<2x1xi32>
    %58 = arith.subi %57, %38 : vector<2x1xi32>
    %59 = arith.addi %56, %58 : vector<2x1xi32>
    %c0_25 = arith.constant 0 : index
    %c1_26 = arith.constant 1 : index
    %60 = vector.load %arg6[%c0_25, %c1_26] : memref<2x2xi32, #tpu.memory_space<vmem>>, vector<2x1xi32>
    tpu.vector_store %arg6[%c0_25, %c1_26], %59 {strides = array<i32>} : memref<2x2xi32, #tpu.memory_space<vmem>>, vector<2x1xi32>,
    %c0_i32_27 = arith.constant 0 : i32
    %61 = arith.cmpi eq, %arg1, %c0_i32_27 : i32
    %62 = arith.extui %61 : i1 to i32
    %c0_i32_28 = arith.constant 0 : i32
    %63 = arith.cmpi ne, %62, %c0_i32_28 : i32
    scf.if %63 {
      %64 = tpu.iota {dimensions = array<i32: 1>} : vector<2x2xi32>
      %c0_29 = arith.constant 0 : index
      %c0_30 = arith.constant 0 : index
      %65 = vector.load %arg6[%c0_29, %c0_30] : memref<2x2xi32, #tpu.memory_space<vmem>>, vector<2x2xi32>
      %c0_i32_31 = arith.constant 0 : i32
      %66 = vector.broadcast %c0_i32_31 : i32 to vector<2x2xi32>
      %67 = arith.cmpi eq, %64, %66 : vector<2x2xi32>
      %c256_i32 = arith.constant 256 : i32
      %c0_i32_32 = arith.constant 0 : i32
      %68 = vector.broadcast %c256_i32 : i32 to vector<2x2xi32>
      %69 = vector.broadcast %c0_i32_32 : i32 to vector<2x2xi32>
      %70 = arith.select %67, %68, %69 : vector<2x2xi1>, vector<2x2xi32>
      %71 = arith.addi %65, %70 : vector<2x2xi32>
      %c0_33 = arith.constant 0 : index
      %c0_34 = arith.constant 0 : index
      %72 = vector.load %arg5[%c0_33, %c0_34] : memref<2x2xi32, #tpu.memory_space<vmem>>, vector<2x2xi32>
      %73 = arith.sitofp %72 : vector<2x2xi32> to vector<2x2xf32>
      %cst_35 = arith.constant 9.99999997E-7 : f32
      %74 = vector.broadcast %cst_35 : f32 to vector<2x2xf32>
      %75 = arith.addf %73, %74 : vector<2x2xf32>
      %76 = arith.sitofp %71 : vector<2x2xi32> to vector<2x2xf32>
      %cst_36 = arith.constant 9.99999997E-7 : f32
      %77 = vector.broadcast %cst_36 : f32 to vector<2x2xf32>
      %78 = arith.addf %76, %77 : vector<2x2xf32>
      %79 = arith.divf %75, %78 : vector<2x2xf32>
      %c0_37 = arith.constant 0 : index
      %c0_38 = arith.constant 0 : index
      %c0_39 = arith.constant 0 : index
      %80 = vector.load %arg4[%c0_37, %c0_38, %c0_39] : memref<1x2x2xf32, #tpu.memory_space<vmem>>, vector<1x2x2xf32>
      %81 = vector.shape_cast %80 : vector<1x2x2xf32> to vector<2x2xf32>
      %82 = vector.shape_cast %79 : vector<2x2xf32> to vector<1x2x2xf32>
      tpu.vector_store %arg4[%c0_37, %c0_38, %c0_39], %82 {strides = array<i32>} : memref<1x2x2xf32, #tpu.memory_space<vmem>>, vector<1x2x2xf32>,
    } else {
    }
    return
  }
  func.func @transform_0(%arg0: i32, %arg1: i32) -> (i32, i32, i32) {
    %c0_i32 = arith.constant 0 : i32
    %c0_i32_0 = arith.constant 0 : i32
    return %arg0, %c0_i32, %arg1 : i32, i32, i32
  }
  func.func @transform_1(%arg0: i32, %arg1: i32) -> (i32, i32) {
    %c0_i32 = arith.constant 0 : i32
    return %arg0, %arg1 : i32, i32
  }
  func.func @transform_2(%arg0: i32, %arg1: i32) -> (i32, i32, i32) {
    %c0_i32 = arith.constant 0 : i32
    %c0_i32_0 = arith.constant 0 : i32
    %c0_i32_1 = arith.constant 0 : i32
    return %arg0, %c0_i32, %c0_i32_0 : i32, i32, i32
  }
}

</mosaic_0001>

<llo_original>
// kernel: tpu_custom_call.1
$region0: #{tpu_custom_call.1}
  #allocation0 [shape = 'u32[]', space=smem, size = 0x4, offset = 0x4, fixed_abs, tag = 'smem constant byte address 0x4 - core index']
  #allocation1 [shape = 'u32[144,128]{1,0:T(1,128)}', space=vmem, size = 0x12000, scoped, tag = 'internal scratch']
  #allocation2 [shape = 's32[2,2]{1,0:T(2,128)}', space=vmem, size = 0x400, scoped, tag = 'scratch operand']
  #allocation3 [shape = 's32[2,2]{1,0:T(2,128)}', space=vmem, size = 0x400, scoped, tag = 'scratch operand']
  %s0 = inlined_call_operand.hbm [shape: f32[2,4,256], index: 0, kind: input, shape index: {}]
  %s1 = inlined_call_operand.vmem [shape: s8[2,256], index: 1, kind: input, shape index: {}]
  %s2 = inlined_call_operand.hbm [shape: f32[1,2,2], index: 2, kind: output, shape index: {}]
  %s3 = sld [smem:[#allocation0]]
  $region30: #{tpu_custom_call.1} parent=0
    _
  %s5 = ssub.s32 1, %s3
  %s6 = scalar_select 0, %s5, %s3
  $region1: #{tpu_custom_call.1} parent=0
    #allocation4 [shape = 'u8[8192]{0}', space=vmem, size = 0x2000, scoped, tag = 'input window, operand 0, single buffered']
    #allocation5 [shape = 's32[1]{0}', space=sflag, size = 0x4, scoped, tag = 'scoped memory for tpu_custom_call.1']
    #allocation6 [shape = 's32[1]{0}', space=sflag, size = 0x4, scoped, tag = 'scoped memory for tpu_custom_call.1']
    #allocation7 [shape = 'u8[1024]{0}', space=vmem, size = 0x400, scoped, tag = 'output window, operand 0, single buffered']
    %7 = vsyncpa [#allocation5], 0
    %8 = vsyncpa [#allocation6], 0
    // Predicated region
    $region2: #{tpu_custom_call.1} parent=1 // pred_check
      _
    $region3: #{tpu_custom_call.1} parent=1 // pred_check_branch
      %10 = sbr.rel (0) target = $region5
    $region4: #{tpu_custom_call.1} parent=1 // pred_region
      %s12 = ssub.s32 256, 256
      %13 = vsyncadd [#allocation5], %s12
      %s14 = sshll.u32 [#allocation4], 4
      %s15 = int_to_ptr.vmem [resolvable:$true] %s14
      %20 = dma.hbm_to_vmem [thread:$0]  %s0, 256, %s15, [#allocation5], 128, 128, 8
    $region5: #{tpu_custom_call.1} parent=1 // pred_fallthru
      _
    // Predicated region
    $region6: #{tpu_custom_call.1} parent=1 // pred_check
      _
    $region7: #{tpu_custom_call.1} parent=1 // pred_check_branch
      %22 = sbr.rel (0) target = $region9
    $region8: #{tpu_custom_call.1} parent=1 // pred_region
      _
    $region9: #{tpu_custom_call.1} parent=1 // pred_fallthru
      _
    // Predicated region
    $region10: #{tpu_custom_call.1} parent=1 // pred_check
      _
    $region11: #{tpu_custom_call.1} parent=1 // pred_check_branch
      %24 = sbr.rel (0) target = $region13
    $region12: #{tpu_custom_call.1} parent=1 // pred_region
      %25 = dma.done [#allocation5], 256
    $region13: #{tpu_custom_call.1} parent=1 // pred_fallthru
      _
    %p26 = scmp.eq.s32.totalorder 0, 0
    // Predicated region
    $region14: #{tpu_custom_call.1} parent=1 // pred_check
      %p27 = pneg %p26
    $region15: #{tpu_custom_call.1} parent=1 // pred_check_branch
      %29 = sbr.rel (%p27) target = $region17
    $region16: #{tpu_custom_call.1} parent=1 // pred_region
      %vm30 = vcmask 9216
      %31 = vst.msk [vmem:[#allocation2] sm:$0x3] %vm30, 0
      %32 = vst.msk [vmem:[#allocation3] sm:$0x3] %vm30, 0
    $region17: #{tpu_custom_call.1} parent=1 // pred_fallthru
      _
    %v33 = vld [vmem:[#allocation4] sm:$0xff]
    %v34 = vld [vmem:[#allocation4 + $0x8] sm:$0xff]
    %v37 = vcombine.high %v33, %v33
    %v38 = vcombine.high %v34, %v34
    %vm41 = vcmask 1043456
    %v42 = vsel %vm41, %v33, -inf
    %v43 = vrot.slane %v42, 4
    %v44 = vmax.f32 %v42, %v43
    %v45 = vrot.slane %v44, 2
    %v46 = vmax.f32 %v44, %v45
    %v47 = vrot.slane %v46, 1
    %v48 = vmax.f32 %v46, %v47
    %v49 = vsel %vm41, %v37, -inf
    %v50 = vrot.slane %v49, 4
    %v51 = vmax.f32 %v49, %v50
    %v52 = vrot.slane %v51, 2
    %v53 = vmax.f32 %v51, %v52
    %v54 = vrot.slane %v53, 1
    %v55 = vmax.f32 %v53, %v54
    %v56 = vsel %vm41, %v34, -inf
    %v57 = vrot.slane %v56, 4
    %v58 = vmax.f32 %v56, %v57
    %v59 = vrot.slane %v58, 2
    %v60 = vmax.f32 %v58, %v59
    %v61 = vrot.slane %v60, 1
    %v62 = vmax.f32 %v60, %v61
    %v63 = vsel %vm41, %v38, -inf
    %v64 = vrot.slane %v63, 4
    %v65 = vmax.f32 %v63, %v64
    %v66 = vrot.slane %v65, 2
    %v67 = vmax.f32 %v65, %v66
    %v68 = vrot.slane %v67, 1
    %v69 = vmax.f32 %v67, %v68
    %v70 = vlaneseq
    %v71 = vshrl.u32 %v70, 7
    %v72 = vsub.s32 0, %v71
    %v73 = vrot.slane %v33, %v72
    %v74 = vlaneseq
    %v75 = vshrl.u32 %v74, 7
    %v76 = vsub.s32 4, %v75
    %v77 = vrot.slane %v33, %v76
    %v78 = vlaneseq
    %v79 = vshrl.u32 %v78, 7
    %v80 = vsub.s32 0, %v79
    %v81 = vrot.slane %v34, %v80
    %v82 = vlaneseq
    %v83 = vshrl.u32 %v82, 7
    %v84 = vsub.s32 4, %v83
    %v85 = vrot.slane %v34, %v84
    %vm90 = vcmp.gt.f32.partialorder %v48, %v73
    %vm91 = vcmp.gt.f32.partialorder %v55, %v77
    %vm92 = vcmp.gt.f32.partialorder %v62, %v81
    %vm93 = vcmp.gt.f32.partialorder %v69, %v85
    %v94 = vld [vmem:[%s1] sm:$0x3]
    %v95 = vunpack.c.0.s8 %v94
    %v96 = vand.u32 %v95, 1
    %vm97 = vcmp.ne.s32.totalorder %v96, 0
    %v98 = vand.u32 %v95, 2
    %vm99 = vcmp.ne.s32.totalorder %v98, 0
    %v100 = vsel %vm90, 1, 0
    %v101 = vsel %vm91, 1, 0
    %v102 = vsel %vm92, 1, 0
    %v103 = vsel %vm93, 1, 0
    %v104 = vcvt.s32.f32 %v100
    %v105 = vcvt.s32.f32 %v101
    %v106 = vcvt.s32.f32 %v102
    %v107 = vcvt.s32.f32 %v103
    %v112 = vrot.slane %v106, 7
    %vm113 = vcmask 1041409
    %v114 = vsel %vm113, %v112, %v104
    %v115 = vrot.slane %v107, 7
    %v116 = vsel %vm113, %v115, %v105
    %vm119 = vcmask 1041408
    %v120 = vsel %vm119, %v114, 0.0
    %v121 = vsel %vm119, %v116, 0.0
    %v122 = vadd.f32 %v120, %v121
    %123 = vadd.xlane.f32.xlu0 %v122
    %v124 = vpop.xlane.xlu0 %123
    %v125 = vcvt.f32.s32.to.zero.pseudo %v124
    %v126 = vsel %vm99, 1, 0
    %v127 = vcvt.s32.f32 %v126
    %v129 = vcombine.high %v127, %v127
    %v131 = vsel %vm119, %v127, 0.0
    %v132 = vsel %vm119, %v129, 0.0
    %v133 = vadd.f32 %v131, %v132
    %134 = vadd.xlane.f32.xlu0 %v133
    %v135 = vpop.xlane.xlu0 %134
    %v136 = vcvt.f32.s32.to.zero.pseudo %v135
    %v137 = vsel %vm97, 1, 0
    %v138 = vcvt.s32.f32 %v137
    %v140 = vcombine.high %v138, %v138
    %v142 = vsel %vm119, %v138, 0.0
    %v143 = vsel %vm119, %v140, 0.0
    %v144 = vadd.f32 %v142, %v143
    %145 = vadd.xlane.f32.xlu0 %v144
    %v146 = vpop.xlane.xlu0 %145
    %v147 = vcvt.f32.s32.to.zero.pseudo %v146
    %v148 = vcombine.high %v126, %v126
    %v149 = vrot.slane %v126, 1
    %v150 = vrot.slane %v148, 1
    %vm151 = vcmp.ne.s32.totalorder %v126, 0
    %vm152 = vcmp.ne.s32.totalorder %v148, 0
    %vm153 = vcmp.ne.s32.totalorder %v149, 0
    %vm154 = vcmp.ne.s32.totalorder %v150, 0
    %vm155 = vmand %vm90, %vm151
    %vm156 = vmand %vm91, %vm152
    %vm157 = vmand %vm92, %vm153
    %vm158 = vmand %vm93, %vm154
    %v159 = vsel %vm155, 1, 0
    %v160 = vsel %vm156, 1, 0
    %v161 = vsel %vm157, 1, 0
    %v162 = vsel %vm158, 1, 0
    %v163 = vcvt.s32.f32 %v159
    %v164 = vcvt.s32.f32 %v160
    %v165 = vcvt.s32.f32 %v161
    %v166 = vcvt.s32.f32 %v162
    %v171 = vrot.slane %v165, 7
    %v172 = vsel %vm113, %v171, %v163
    %v173 = vrot.slane %v166, 7
    %v174 = vsel %vm113, %v173, %v164
    %v177 = vsel %vm119, %v172, 0.0
    %v178 = vsel %vm119, %v174, 0.0
    %v179 = vadd.f32 %v177, %v178
    %180 = vadd.xlane.f32.xlu0 %v179
    %v181 = vpop.xlane.xlu0 %180
    %v182 = vcvt.f32.s32.to.zero.pseudo %v181
    %v183 = vcombine.high %v137, %v137
    %v184 = vrot.slane %v137, 1
    %v185 = vrot.slane %v183, 1
    %vm186 = vcmp.ne.s32.totalorder %v137, 0
    %vm187 = vcmp.ne.s32.totalorder %v183, 0
    %vm188 = vcmp.ne.s32.totalorder %v184, 0
    %vm189 = vcmp.ne.s32.totalorder %v185, 0
    %vm190 = vmand %vm90, %vm186
    %vm191 = vmand %vm91, %vm187
    %vm192 = vmand %vm92, %vm188
    %vm193 = vmand %vm93, %vm189
    %v194 = vsel %vm190, 1, 0
    %v195 = vsel %vm191, 1, 0
    %v196 = vsel %vm192, 1, 0
    %v197 = vsel %vm193, 1, 0
    %v198 = vcvt.s32.f32 %v194
    %v199 = vcvt.s32.f32 %v195
    %v200 = vcvt.s32.f32 %v196
    %v201 = vcvt.s32.f32 %v197
    %v206 = vrot.slane %v200, 7
    %v207 = vsel %vm113, %v206, %v198
    %v208 = vrot.slane %v201, 7
    %v209 = vsel %vm113, %v208, %v199
    %v212 = vsel %vm119, %v207, 0.0
    %v213 = vsel %vm119, %v209, 0.0
    %v214 = vadd.f32 %v212, %v213
    %215 = vadd.xlane.f32.xlu0 %v214
    %v216 = vpop.xlane.xlu0 %215
    %v217 = vcvt.f32.s32.to.zero.pseudo %v216
    %v218 = vld [vmem:[#allocation2] sm:$0x3]
    %v219 = vsub.s32 %v147, %v217
    %v220 = vadd.s32 %v218, %v219
    %vm221 = vcmask 1024
    %222 = vst.msk [vmem:[#allocation2] sm:$0x3] %vm221, %v220
    %v223 = vld [vmem:[#allocation2] sm:$0x3]
    %v224 = vadd.s32 %v223, %v182
    %vm225 = vcmask 9224
    %226 = vst.msk [vmem:[#allocation2] sm:$0x3] %vm225, %v224
    %v227 = vld [vmem:[#allocation3] sm:$0x3]
    %v228 = vsub.s32 %v217, %v125
    %v229 = vadd.s32 %v227, %v228
    %230 = vst.msk [vmem:[#allocation3] sm:$0x3] %vm221, %v229
    %v231 = vld [vmem:[#allocation3] sm:$0x3]
    %v232 = vadd.s32 %v125, %v136
    %v233 = vsub.s32 %v232, %v182
    %v234 = vadd.s32 %v231, %v233
    %235 = vst.msk [vmem:[#allocation3] sm:$0x3] %vm225, %v234
    // Predicated region
    $region18: #{tpu_custom_call.1} parent=1 // pred_check
      %p236 = pneg %p26
    $region19: #{tpu_custom_call.1} parent=1 // pred_check_branch
      %238 = sbr.rel (%p236) target = $region21
    $region20: #{tpu_custom_call.1} parent=1 // pred_region
      %v239 = vlaneseq
      %v240 = vand.u32 %v239, 127
      %v241 = vld [vmem:[#allocation3] sm:$0x3]
      %vm242 = vcmp.eq.s32.totalorder %v240, 0
      %v243 = vsel %vm242, 256, 0
      %v244 = vadd.s32 %v241, %v243
      %v245 = vld [vmem:[#allocation2] sm:$0x3]
      %v246 = vcvt.s32.f32 %v245
      %v247 = vadd.f32 %v246, 1e-06
      %v248 = vcvt.s32.f32 %v244
      %v249 = vadd.f32 %v248, 1e-06
      %v250 = vrcp.pop %v249
      %v251 = vmul.f32 %v247, %v250
      %vm252 = vcmask 9216
      %253 = vst.msk [vmem:[#allocation7] sm:$0x3] %vm252, %v251
    $region21: #{tpu_custom_call.1} parent=1 // pred_fallthru
      _
    // Predicated region
    $region22: #{tpu_custom_call.1} parent=1 // pred_check
      _
    $region23: #{tpu_custom_call.1} parent=1 // pred_check_branch
      %255 = sbr.rel (0) target = $region25
    $region24: #{tpu_custom_call.1} parent=1 // pred_region
      %s257 = ssub.s32 32, 32
      %258 = vsyncadd [#allocation6], %s257
      %s260 = sshll.u32 [#allocation7], 4
      %s261 = int_to_ptr.vmem [resolvable:$true] %s260
      %263 = dma.vmem_to_hbm [thread:$0]  %s261, 32, %s2, [#allocation6]
    $region25: #{tpu_custom_call.1} parent=1 // pred_fallthru
      _
    // Predicated region
    $region26: #{tpu_custom_call.1} parent=1 // pred_check
      _
    $region27: #{tpu_custom_call.1} parent=1 // pred_check_branch
      %265 = sbr.rel (0) target = $region29
    $region28: #{tpu_custom_call.1} parent=1 // pred_region
      %266 = dma.done [#allocation6], 32
    $region29: #{tpu_custom_call.1} parent=1 // pred_fallthru
      _
    %267 = vsyncpa [#allocation5], 1
    %268 = vsyncpa [#allocation6], 1

</llo_original>
